<compile_context>
chip_gen: v5e
topology: v5e:2x2
jax: 0.10.0
libtpu: 0.0.40
codegen_flags: <defaults>
</compile_context>

<pallas_src>
import functools
import math

import jax
import jax.numpy as jnp
from jax.experimental import pallas as pl
from jax.experimental.pallas import tpu as pltpu


def _round_up(x, m):
    return ((x + m - 1) // m) * m


def policy_net_kernel(x_ref, w1_ref, b1_ref, wh_ref, bh_ref, out_ref,
                      *, a_dim, total_dim):
    x = x_ref[...]                                                   # [bm, S]
    # fc1 + ReLU  (K = state_dim, tiny but MXU handles it; not the bottleneck)
    h = jnp.dot(x, w1_ref[...], preferred_element_type=jnp.float32) + b1_ref[...]
    h = jnp.maximum(h, 0.0)                                          # [bm, H]
    # fused heads: one MXU dot producing lane-padded logits [bm, out_pad]
    logits = jnp.dot(h, wh_ref[...], preferred_element_type=jnp.float32) + bh_ref[...]

    col = jax.lax.broadcasted_iota(jnp.int32, logits.shape, 1)
    mask_bw = col < a_dim
    mask_f = jnp.logical_and(col >= a_dim, col < total_dim)

    neg = jnp.float32(-3.0e38)
    # Per-group row maxima.
    m_bw = jnp.max(jnp.where(mask_bw, logits, neg), axis=-1, keepdims=True)
    m_f = jnp.max(jnp.where(mask_f, logits, neg), axis=-1, keepdims=True)
    # Per-lane shifted logits: valid lanes get their group max subtracted,
    # padded lanes get -3e38 so exp underflows to exactly 0.
    z = jnp.where(mask_bw, logits - m_bw,
                  jnp.where(mask_f, logits - m_f, neg))
    e = jnp.exp(z)                                  # single EUP pass per tile

    s_bw = jnp.sum(jnp.where(mask_bw, e, 0.0), axis=-1, keepdims=True)
    s_f = jnp.sum(jnp.where(mask_f, e, 0.0), axis=-1, keepdims=True)

    def _recip(s):
        r = pl.reciprocal(s, approx=True)           # EUP vrcp
        return r * (2.0 - s * r)                    # one Newton step -> ~f32

    inv = jnp.where(mask_bw, _recip(s_bw), _recip(s_f))
    out_ref[...] = e * inv                          # padded lanes are exact 0


def prepare_fused_params(params, out_lanes=128):
    """One-time (per parameter update) fusion of the two head layers.

    Hoisted out of the forward hot path: the concatenated / zero-padded head
    weight & bias and the fc1 weight/bias are built here, not per call.
    """
    w1, b1, wb, bb, wf, bf = params
    f32 = jnp.float32
    H = w1.shape[1]
    a_dim = wb.shape[1]
    f_dim = wf.shape[1]
    total = a_dim + f_dim
    out_pad = max(out_lanes, _round_up(total, out_lanes))

    bb = jnp.reshape(bb, (-1,))
    bf = jnp.reshape(bf, (-1,))
    wh = (jnp.zeros((H, out_pad), f32)
          .at[:, :a_dim].set(wb.astype(f32))
          .at[:, a_dim:total].set(wf.astype(f32)))
    bh = (jnp.zeros((1, out_pad), f32)
          .at[:, :a_dim].set(bb.astype(f32))
          .at[:, a_dim:total].set(bf.astype(f32)))

    return {
        "w1": w1.astype(f32),
        "b1": jnp.reshape(b1, (1, H)).astype(f32),
        "wh": wh,
        "bh": bh,
        "a_dim": a_dim,
        "total": total,
        "out_pad": out_pad,
    }


def policy_net_forward(x, fused):
    """x: [B, state_dim] float32.  Returns (bandwidth [B, A], f [B, 10*A])."""
    w1, b1, wh, bh = fused["w1"], fused["b1"], fused["wh"], fused["bh"]
    a_dim, total, out_pad = fused["a_dim"], fused["total"], fused["out_pad"]
    B, S = x.shape
    H = w1.shape[1]

    # Batch tile: big enough to amortize the ~0.35us per-grid-step overhead,
    # capped at 1024, and chosen so the "parallel" batch grid keeps >= 2 steps
    # when B allows it (v7x has 2 TensorCores sharding the parallel axis).
    bm = min(1024, max(8, _round_up((B + 1) // 2, 8)))
    if bm >= B:
        bm = B              # single block == full batch dim (legal BlockSpec)
    grid = (pl.cdiv(B, bm),)

    cost = pl.CostEstimate(
        flops=2 * B * (S * H + H * out_pad),
        transcendentals=B * out_pad,                       # single exp pass
        bytes_accessed=4 * (B * S + S * H + H
                            + H * out_pad + out_pad + B * out_pad),
    )

    out = pl.pallas_call(
        functools.partial(policy_net_kernel, a_dim=a_dim, total_dim=total),
        out_shape=jax.ShapeDtypeStruct((B, out_pad), jnp.float32),
        grid=grid,
        in_specs=[
            pl.BlockSpec((bm, S), lambda i: (i, 0)),        # x tile (unpadded)
            pl.BlockSpec((S, H), lambda i: (0, 0)),         # w1: VMEM-resident
            pl.BlockSpec((1, H), lambda i: (0, 0)),         # b1
            pl.BlockSpec((H, out_pad), lambda i: (0, 0)),   # fused head weights
            pl.BlockSpec((1, out_pad), lambda i: (0, 0)),   # fused head bias
        ],
        out_specs=pl.BlockSpec((bm, out_pad), lambda i: (i, 0)),
        compiler_params=pltpu.CompilerParams(
            dimension_semantics=("parallel",),
            vmem_limit_bytes=32 * 1024 * 1024,   # headroom for big tiles on v5e
        ),
        cost_estimate=cost,
    )(x.astype(jnp.float32), w1, b1, wh, bh)

    bandwidth = out[:, :a_dim]
    f_out = out[:, a_dim:total]
    return bandwidth, f_out


def init_params(key, state_dim, discrete_action_i_dim, hidden_dim=128):
    """Deterministic init mimicking torch.nn.Linear default (uniform +-1/sqrt(fan_in)).
    Weights stored as [in_features, out_features] so forward is x @ W + b."""
    def linear(key, fan_in, fan_out):
        kw, kb = jax.random.split(key)
        bound = 1.0 / math.sqrt(fan_in)
        w = jax.random.uniform(kw, (fan_in, fan_out), jnp.float32, -bound, bound)
        b = jax.random.uniform(kb, (1, fan_out), jnp.float32, -bound, bound)
        return w, b

    k1, k2, k3 = jax.random.split(key, 3)
    w1, b1 = linear(k1, state_dim, hidden_dim)
    wb, bb = linear(k2, hidden_dim, discrete_action_i_dim)
    wf, bf = linear(k3, hidden_dim, discrete_action_i_dim * 10)
    return (w1, b1, wb, bb, wf, bf)


def reference_forward(x, params):
    """Pure-JAX reference for the PyTorch forward semantics."""
    w1, b1, wb, bb, wf, bf = params
    h = jnp.maximum(x @ w1 + b1, 0.0)
    bw = jax.nn.softmax(h @ wb + bb, axis=1)
    f = jax.nn.softmax(h @ wf + bf, axis=1)
    return bw, f


def _check(batch, params, key, state_dim, a_dim, fused):
    x = jax.random.normal(key, (batch, state_dim), jnp.float32)
    bw, f = jax.block_until_ready(policy_net_forward(x, fused))
    bw_ref, f_ref = reference_forward(x, params)
    assert bw.shape == (batch, a_dim)
    assert f.shape == (batch, a_dim * 10)
    assert jnp.allclose(bw, bw_ref, atol=1e-5), "bandwidth mismatch"
    assert jnp.allclose(f, f_ref, atol=1e-5), "f mismatch"
    assert jnp.allclose(jnp.sum(bw, axis=1), 1.0, atol=1e-5)
    assert jnp.allclose(jnp.sum(f, axis=1), 1.0, atol=1e-5)


if __name__ == "__main__":
    state_dim = 5
    discrete_action_i_dim = 4
    hidden_dim = 128

    key = jax.random.PRNGKey(0)
    kx1, kx2, kp = jax.random.split(key, 3)
    params = init_params(kp, state_dim, discrete_action_i_dim, hidden_dim)
    fused = prepare_fused_params(params)          # hoisted out of forward path

    # Small-batch check (single grid step).
    _check(8, params, kx1, state_dim, discrete_action_i_dim, fused)
    # Larger batch: exercises the multi-step parallel grid + masked boundary.
    _check(200, params, kx2, state_dim, discrete_action_i_dim, fused)

    print("KERNEL_OK")
</pallas_src>

<mosaic_0001>
module attributes {stable_mosaic.version = 11 : i64} {
  func.func @policy_net_kernel(%arg0: i32, %arg1: memref<8x5xf32, #tpu.memory_space<vmem>>, %arg2: memref<5x128xf32, #tpu.memory_space<vmem>>, %arg3: memref<1x128xf32, #tpu.memory_space<vmem>>, %arg4: memref<128x128xf32, #tpu.memory_space<vmem>>, %arg5: memref<1x128xf32, #tpu.memory_space<vmem>>, %arg6: memref<8x128xf32, #tpu.memory_space<vmem>>) attributes {dimension_semantics = [#tpu.dimension_semantics<parallel>], iteration_bounds = array<i64: 1>, scalar_prefetch = 0 : i64, scratch_operands = 0 : i64, tpu.core_type = #tpu.core_type<tc>, window_params = [{transform_indices = @transform_0, window_bounds = array<i64: 8, 5>}, {pipeline_mode = #tpu.pipeline_mode<synchronous>, transform_indices = @transform_1, window_bounds = array<i64: 5, 128>}, {pipeline_mode = #tpu.pipeline_mode<synchronous>, transform_indices = @transform_2, window_bounds = array<i64: 1, 128>}, {pipeline_mode = #tpu.pipeline_mode<synchronous>, transform_indices = @transform_3, window_bounds = array<i64: 128, 128>}, {pipeline_mode = #tpu.pipeline_mode<synchronous>, transform_indices = @transform_4, window_bounds = array<i64: 1, 128>}, {transform_indices = @transform_5, window_bounds = array<i64: 8, 128>}]} {
    %c0 = arith.constant 0 : index
    %c0_0 = arith.constant 0 : index
    %0 = vector.load %arg1[%c0, %c0_0] : memref<8x5xf32, #tpu.memory_space<vmem>>, vector<8x5xf32>
    %c0_1 = arith.constant 0 : index
    %c0_2 = arith.constant 0 : index
    %1 = vector.load %arg2[%c0_1, %c0_2] : memref<5x128xf32, #tpu.memory_space<vmem>>, vector<5x128xf32>
    %cst = arith.constant dense<0.000000e+00> : vector<8x128xf32>
    %2 = tpu.matmul %0, %1, %cst {dimension_numbers = #tpu.dot_dimension_numbers<[1], [0], [0], [1], [0, 0, 1, 1], [], []>} : vector<8x5xf32>, vector<5x128xf32>, vector<8x128xf32> -> vector<8x128xf32>
    %c0_3 = arith.constant 0 : index
    %c0_4 = arith.constant 0 : index
    %3 = vector.load %arg3[%c0_3, %c0_4] : memref<1x128xf32, #tpu.memory_space<vmem>>, vector<1x128xf32>
    %4 = vector.broadcast %3 : vector<1x128xf32> to vector<8x128xf32>
    %5 = arith.addf %2, %4 : vector<8x128xf32>
    %cst_5 = arith.constant 0.000000e+00 : f32
    %6 = vector.broadcast %cst_5 : f32 to vector<8x128xf32>
    %7 = arith.maximumf %5, %6 : vector<8x128xf32>
    %c0_6 = arith.constant 0 : index
    %c0_7 = arith.constant 0 : index
    %8 = vector.load %arg4[%c0_6, %c0_7] : memref<128x128xf32, #tpu.memory_space<vmem>>, vector<128x128xf32>
    %cst_8 = arith.constant dense<0.000000e+00> : vector<8x128xf32>
    %9 = tpu.matmul %7, %8, %cst_8 {dimension_numbers = #tpu.dot_dimension_numbers<[1], [0], [0], [1], [0, 0, 1, 1], [], []>} : vector<8x128xf32>, vector<128x128xf32>, vector<8x128xf32> -> vector<8x128xf32>
    %c0_9 = arith.constant 0 : index
    %c0_10 = arith.constant 0 : index
    %10 = vector.load %arg5[%c0_9, %c0_10] : memref<1x128xf32, #tpu.memory_space<vmem>>, vector<1x128xf32>
    %11 = vector.broadcast %10 : vector<1x128xf32> to vector<8x128xf32>
    %12 = arith.addf %9, %11 : vector<8x128xf32>
    %13 = tpu.iota {dimensions = array<i32: 1>} : vector<8x128xi32>
    %c4_i32 = arith.constant 4 : i32
    %14 = vector.broadcast %c4_i32 : i32 to vector<8x128xi32>
    %15 = arith.cmpi slt, %13, %14 : vector<8x128xi32>
    %c4_i32_11 = arith.constant 4 : i32
    %16 = vector.broadcast %c4_i32_11 : i32 to vector<8x128xi32>
    %17 = arith.cmpi sge, %13, %16 : vector<8x128xi32>
    %c44_i32 = arith.constant 44 : i32
    %18 = vector.broadcast %c44_i32 : i32 to vector<8x128xi32>
    %19 = arith.cmpi slt, %13, %18 : vector<8x128xi32>
    %20 = arith.andi %17, %19 : vector<8x128xi1>
    %cst_12 = arith.constant -3.000000e+38 : f32
    %21 = vector.broadcast %cst_12 : f32 to vector<8x128xf32>
    %22 = arith.select %15, %12, %21 : vector<8x128xi1>, vector<8x128xf32>
    %cst_13 = arith.constant dense<0xFF800000> : vector<8xf32>
    %23 = vector.multi_reduction <maximumf>, %22, %cst_13 [1] : vector<8x128xf32> to vector<8xf32>
    %24 = vector.shape_cast %23 : vector<8xf32> to vector<8x1xf32>
    %cst_14 = arith.constant -3.000000e+38 : f32
    %25 = vector.broadcast %cst_14 : f32 to vector<8x128xf32>
    %26 = arith.select %20, %12, %25 : vector<8x128xi1>, vector<8x128xf32>
    %cst_15 = arith.constant dense<0xFF800000> : vector<8xf32>
    %27 = vector.multi_reduction <maximumf>, %26, %cst_15 [1] : vector<8x128xf32> to vector<8xf32>
    %28 = vector.shape_cast %27 : vector<8xf32> to vector<8x1xf32>
    %29 = vector.broadcast %24 : vector<8x1xf32> to vector<8x128xf32>
    %30 = arith.subf %12, %29 : vector<8x128xf32>
    %31 = vector.broadcast %28 : vector<8x1xf32> to vector<8x128xf32>
    %32 = arith.subf %12, %31 : vector<8x128xf32>
    %cst_16 = arith.constant -3.000000e+38 : f32
    %33 = vector.broadcast %cst_16 : f32 to vector<8x128xf32>
    %34 = arith.select %20, %32, %33 : vector<8x128xi1>, vector<8x128xf32>
    %35 = arith.select %15, %30, %34 : vector<8x128xi1>, vector<8x128xf32>
    %36 = math.exp %35 : vector<8x128xf32>
    %cst_17 = arith.constant 0.000000e+00 : f32
    %37 = vector.broadcast %cst_17 : f32 to vector<8x128xf32>
    %38 = arith.select %15, %36, %37 : vector<8x128xi1>, vector<8x128xf32>
    %cst_18 = arith.constant dense<0.000000e+00> : vector<8xf32>
    %39 = vector.multi_reduction <add>, %38, %cst_18 [1] : vector<8x128xf32> to vector<8xf32>
    %40 = vector.shape_cast %39 : vector<8xf32> to vector<8x1xf32>
    %cst_19 = arith.constant 0.000000e+00 : f32
    %41 = vector.broadcast %cst_19 : f32 to vector<8x128xf32>
    %42 = arith.select %20, %36, %41 : vector<8x128xi1>, vector<8x128xf32>
    %cst_20 = arith.constant dense<0.000000e+00> : vector<8xf32>
    %43 = vector.multi_reduction <add>, %42, %cst_20 [1] : vector<8x128xf32> to vector<8xf32>
    %44 = vector.shape_cast %43 : vector<8xf32> to vector<8x1xf32>
    %45 = tpu.reciprocal %40 {approx = true} : vector<8x1xf32> -> vector<8x1xf32>
    %46 = arith.mulf %40, %45 : vector<8x1xf32>
    %cst_21 = arith.constant 2.000000e+00 : f32
    %47 = vector.broadcast %cst_21 : f32 to vector<8x1xf32>
    %48 = arith.subf %47, %46 : vector<8x1xf32>
    %49 = arith.mulf %45, %48 : vector<8x1xf32>
    %50 = tpu.reciprocal %44 {approx = true} : vector<8x1xf32> -> vector<8x1xf32>
    %51 = arith.mulf %44, %50 : vector<8x1xf32>
    %cst_22 = arith.constant 2.000000e+00 : f32
    %52 = vector.broadcast %cst_22 : f32 to vector<8x1xf32>
    %53 = arith.subf %52, %51 : vector<8x1xf32>
    %54 = arith.mulf %50, %53 : vector<8x1xf32>
    %55 = vector.shape_cast %49 : vector<8x1xf32> to vector<8x1xf32>
    %56 = vector.broadcast %55 : vector<8x1xf32> to vector<8x128xf32>
    %57 = vector.shape_cast %54 : vector<8x1xf32> to vector<8x1xf32>
    %58 = vector.broadcast %57 : vector<8x1xf32> to vector<8x128xf32>
    %59 = arith.select %15, %56, %58 : vector<8x128xi1>, vector<8x128xf32>
    %60 = arith.mulf %36, %59 : vector<8x128xf32>
    %c0_23 = arith.constant 0 : index
    %c0_24 = arith.constant 0 : index
    %61 = vector.load %arg6[%c0_23, %c0_24] : memref<8x128xf32, #tpu.memory_space<vmem>>, vector<8x128xf32>
    tpu.vector_store %arg6[%c0_23, %c0_24], %60 {strides = array<i32>} : memref<8x128xf32, #tpu.memory_space<vmem>>, vector<8x128xf32>,
    return
  }
  func.func @transform_0(%arg0: i32) -> (i32, i32) {
    %c0_i32 = arith.constant 0 : i32
    %c0_i32_0 = arith.constant 0 : i32
    return %arg0, %c0_i32 : i32, i32
  }
  func.func @transform_1(%arg0: i32) -> (i32, i32) {
    %c0_i32 = arith.constant 0 : i32
    %c0_i32_0 = arith.constant 0 : i32
    %c0_i32_1 = arith.constant 0 : i32
    return %c0_i32, %c0_i32_0 : i32, i32
  }
  func.func @transform_2(%arg0: i32) -> (i32, i32) {
    %c0_i32 = arith.constant 0 : i32
    %c0_i32_0 = arith.constant 0 : i32
    %c0_i32_1 = arith.constant 0 : i32
    return %c0_i32, %c0_i32_0 : i32, i32
  }
  func.func @transform_3(%arg0: i32) -> (i32, i32) {
    %c0_i32 = arith.constant 0 : i32
    %c0_i32_0 = arith.constant 0 : i32
    %c0_i32_1 = arith.constant 0 : i32
    return %c0_i32, %c0_i32_0 : i32, i32
  }
  func.func @transform_4(%arg0: i32) -> (i32, i32) {
    %c0_i32 = arith.constant 0 : i32
    %c0_i32_0 = arith.constant 0 : i32
    %c0_i32_1 = arith.constant 0 : i32
    return %c0_i32, %c0_i32_0 : i32, i32
  }
  func.func @transform_5(%arg0: i32) -> (i32, i32) {
    %c0_i32 = arith.constant 0 : i32
    %c0_i32_0 = arith.constant 0 : i32
    return %arg0, %c0_i32 : i32, i32
  }
}

</mosaic_0001>

<llo_original>
// kernel: tpu_custom_call.1
$region0: #{tpu_custom_call.1}
  #allocation0 [shape = 'u32[]', space=smem, size = 0x4, offset = 0x4, fixed_abs, tag = 'smem constant byte address 0x4 - core index']
  #allocation1 [shape = 'u32[72,128]{1,0:T(1,128)}', space=vmem, size = 0x9000, scoped, tag = 'internal scratch']
  %s0 = inlined_call_operand.hbm [shape: f32[8,5], index: 0, kind: input, shape index: {}]
  %s1 = inlined_call_operand.hbm [shape: f32[5,128], index: 1, kind: input, shape index: {}]
  %s2 = inlined_call_operand.vmem [shape: f32[1,128], index: 2, kind: input, shape index: {}]
  %s3 = inlined_call_operand.hbm [shape: f32[128,128], index: 3, kind: input, shape index: {}]
  %s4 = inlined_call_operand.vmem [shape: f32[1,128], index: 4, kind: input, shape index: {}]
  %s5 = inlined_call_operand.hbm [shape: f32[8,128], index: 5, kind: output, shape index: {}]
  %s6 = sld [smem:[#allocation0]]
  $region42: #{tpu_custom_call.1} parent=0
    _
  %s8 = ssub.s32 1, %s6
  %s9 = scalar_select 0, %s8, %s6
  $region1: #{tpu_custom_call.1} parent=0
    #allocation2 [shape = 'u8[4096]{0}', space=vmem, size = 0x1000, scoped, tag = 'input window, operand 0, single buffered']
    #allocation3 [shape = 's32[1]{0}', space=sflag, size = 0x4, scoped, tag = 'scoped memory for tpu_custom_call.1']
    #allocation4 [shape = 's32[1]{0}', space=sflag, size = 0x4, scoped, tag = 'scoped memory for tpu_custom_call.1']
    #allocation5 [shape = 'u8[4096]{0}', space=vmem, size = 0x1000, scoped, tag = 'input window, operand 1, single buffered']
    #allocation6 [shape = 's32[1]{0}', space=sflag, size = 0x4, scoped, tag = 'scoped memory for tpu_custom_call.1']
    #allocation7 [shape = 'u8[65536]{0}', space=vmem, size = 0x10000, scoped, tag = 'input window, operand 3, single buffered']
    #allocation8 [shape = 'u8[4096]{0}', space=vmem, size = 0x1000, scoped, tag = 'output window, operand 0, single buffered']
    %10 = vsyncpa [#allocation3], 0
    %11 = vsyncpa [#allocation6], 0
    %12 = vsyncpa [#allocation4], 0
    // Predicated region
    $region2: #{tpu_custom_call.1} parent=1 // pred_check
      _
    $region3: #{tpu_custom_call.1} parent=1 // pred_check_branch
      %14 = sbr.rel (0) target = $region5
    $region4: #{tpu_custom_call.1} parent=1 // pred_region
      %16 = vsyncadd [#allocation3], 0
      %s18 = sshll.u32 %s0, 4
      %s19 = int_to_ptr.hbm [resolvable:$true] %s18
      %s20 = sshll.u32 [#allocation2], 4
      %s21 = int_to_ptr.vmem [resolvable:$true] %s20
      %23 = dma.hbm_to_vmem [thread:$0]  %s19, 128, %s21, [#allocation3]
    $region5: #{tpu_custom_call.1} parent=1 // pred_fallthru
      _
    // Predicated region
    $region6: #{tpu_custom_call.1} parent=1 // pred_check
      _
    $region7: #{tpu_custom_call.1} parent=1 // pred_check_branch
      %25 = sbr.rel (0) target = $region9
    $region8: #{tpu_custom_call.1} parent=1 // pred_region
      %27 = vsyncadd [#allocation6], 0
      %s29 = sshll.u32 %s1, 4
      %s30 = int_to_ptr.hbm [resolvable:$true] %s29
      %s31 = sshll.u32 [#allocation5], 4
      %s32 = int_to_ptr.vmem [resolvable:$true] %s31
      %34 = dma.hbm_to_vmem [thread:$0]  %s30, 128, %s32, [#allocation6]
    $region9: #{tpu_custom_call.1} parent=1 // pred_fallthru
      _
    // Predicated region
    $region10: #{tpu_custom_call.1} parent=1 // pred_check
      _
    $region11: #{tpu_custom_call.1} parent=1 // pred_check_branch
      %36 = sbr.rel (0) target = $region13
    $region12: #{tpu_custom_call.1} parent=1 // pred_region
      _
    $region13: #{tpu_custom_call.1} parent=1 // pred_fallthru
      _
    // Predicated region
    $region14: #{tpu_custom_call.1} parent=1 // pred_check
      _
    $region15: #{tpu_custom_call.1} parent=1 // pred_check_branch
      %38 = sbr.rel (0) target = $region17
    $region16: #{tpu_custom_call.1} parent=1 // pred_region
      %40 = vsyncadd [#allocation6], 0
      %s41 = sshll.u32 %s3, 4
      %s42 = int_to_ptr.hbm [resolvable:$true] %s41
      %s43 = sshll.u32 [#allocation7], 4
      %s44 = int_to_ptr.vmem [resolvable:$true] %s43
      %49 = dma.hbm_to_vmem [thread:$0]  %s42, 2048, %s44, [#allocation6], 128, 128, 8
    $region17: #{tpu_custom_call.1} parent=1 // pred_fallthru
      _
    // Predicated region
    $region18: #{tpu_custom_call.1} parent=1 // pred_check
      _
    $region19: #{tpu_custom_call.1} parent=1 // pred_check_branch
      %51 = sbr.rel (0) target = $region21
    $region20: #{tpu_custom_call.1} parent=1 // pred_region
      _
    $region21: #{tpu_custom_call.1} parent=1 // pred_fallthru
      _
    // Predicated region
    $region22: #{tpu_custom_call.1} parent=1 // pred_check
      _
    $region23: #{tpu_custom_call.1} parent=1 // pred_check_branch
      %53 = sbr.rel (0) target = $region25
    $region24: #{tpu_custom_call.1} parent=1 // pred_region
      %55 = dma.done [#allocation3], 128
    $region25: #{tpu_custom_call.1} parent=1 // pred_fallthru
      _
    // Predicated region
    $region26: #{tpu_custom_call.1} parent=1 // pred_check
      _
    $region27: #{tpu_custom_call.1} parent=1 // pred_check_branch
      %57 = sbr.rel (0) target = $region29
    $region28: #{tpu_custom_call.1} parent=1 // pred_region
      %59 = dma.done [#allocation6], 128
    $region29: #{tpu_custom_call.1} parent=1 // pred_fallthru
      _
    // Predicated region
    $region30: #{tpu_custom_call.1} parent=1 // pred_check
      _
    $region31: #{tpu_custom_call.1} parent=1 // pred_check_branch
      %61 = sbr.rel (0) target = $region33
    $region32: #{tpu_custom_call.1} parent=1 // pred_region
      %63 = dma.done [#allocation6], 2048
    $region33: #{tpu_custom_call.1} parent=1 // pred_fallthru
      _
    %v64 = vld [vmem:[#allocation2] sm:$0xff]
    %v65 = vld [vmem:[#allocation5] sm:$0x1f]
    %v66 = vld [vmem:[%s2] sm:$0x1]
    %v68 = vperm.slane %v66, 0
    %vm70 = vcmask 39936
    %v72 = vsel %vm70, %v64, 0
    %vm74 = vcmask 1044480
    %v76 = vsel %vm74, %v65, 0
    %78 = vmatpush.msra.mxu0 0.0
    %79 = vmatpush.msra.mxu0 0.0
    %80 = vmatpush.msra.mxu0 0.0
    %81 = vmatpush.msra.mxu0 0.0
    %82 = vmatpush.msra.mxu0 0.0
    %83 = vmatpush.msra.mxu0 0.0
    %84 = vmatpush.msra.mxu0 0.0
    %85 = vmatpush.msra.mxu0 0.0
    %86 = vmatpush.msra.mxu0 0.0
    %87 = vmatpush.msra.mxu0 0.0
    %88 = vmatpush.msra.mxu0 0.0
    %89 = vmatpush.msra.mxu0 0.0
    %90 = vmatpush.msra.mxu0 0.0
    %91 = vmatpush.msra.mxu0 0.0
    %92 = vmatpush.msra.mxu0 0.0
    %93 = vmatpush.msra.mxu0 %v76
    %94 = vmatmul.f32.gmra.mxu0 %v72
    %v95 = vpop.f32.mrf.mxu0
    %v96 = vadd.f32 %v68, %v95
    %97 = vdwg.mxu0
    %v98 = vmax.f32 %v96, 0.0
    %v99 = vld [vmem:[#allocation7] sm:$0xff]
    %v100 = vld [vmem:[#allocation7 + $0x8] sm:$0xff]
    %v101 = vld [vmem:[#allocation7 + $0x10] sm:$0xff]
    %v102 = vld [vmem:[#allocation7 + $0x18] sm:$0xff]
    %v103 = vld [vmem:[#allocation7 + $0x20] sm:$0xff]
    %v104 = vld [vmem:[#allocation7 + $0x28] sm:$0xff]
    %v105 = vld [vmem:[#allocation7 + $0x30] sm:$0xff]
    %v106 = vld [vmem:[#allocation7 + $0x38] sm:$0xff]
    %v107 = vld [vmem:[#allocation7 + $0x40] sm:$0xff]
    %v108 = vld [vmem:[#allocation7 + $0x48] sm:$0xff]
    %v109 = vld [vmem:[#allocation7 + $0x50] sm:$0xff]
    %v110 = vld [vmem:[#allocation7 + $0x58] sm:$0xff]
    %v111 = vld [vmem:[#allocation7 + $0x60] sm:$0xff]
    %v112 = vld [vmem:[#allocation7 + $0x68] sm:$0xff]
    %v113 = vld [vmem:[#allocation7 + $0x70] sm:$0xff]
    %v114 = vld [vmem:[#allocation7 + $0x78] sm:$0xff]
    %v115 = vld [vmem:[%s4] sm:$0x1]
    %v117 = vperm.slane %v115, 0
    %119 = vmatpush.msra.mxu0 %v114
    %120 = vmatpush.msra.mxu0 %v113
    %121 = vmatpush.msra.mxu0 %v112
    %122 = vmatpush.msra.mxu0 %v111
    %123 = vmatpush.msra.mxu0 %v110
    %124 = vmatpush.msra.mxu0 %v109
    %125 = vmatpush.msra.mxu0 %v108
    %126 = vmatpush.msra.mxu0 %v107
    %127 = vmatpush.msra.mxu0 %v106
    %128 = vmatpush.msra.mxu0 %v105
    %129 = vmatpush.msra.mxu0 %v104
    %130 = vmatpush.msra.mxu0 %v103
    %131 = vmatpush.msra.mxu0 %v102
    %132 = vmatpush.msra.mxu0 %v101
    %133 = vmatpush.msra.mxu0 %v100
    %134 = vmatpush.msra.mxu0 %v99
    %135 = vmatmul.f32.gmra.mxu0 %v98
    %v136 = vpop.f32.mrf.mxu0
    %v137 = vadd.f32 %v117, %v136
    %138 = vdwg.mxu0
    %v139 = vlaneseq
    %v140 = vand.u32 %v139, 127
    %vm141 = vcmp.lt.s32.totalorder %v140, 4
    %vm142 = vcmp.ge.s32.totalorder %v140, 4
    %vm143 = vcmp.lt.s32.totalorder %v140, 44
    %vm144 = vmand %vm142, %vm143
    %v145 = vsel %vm141, %v137, -3e+38
    %146 = vmax.xlane.f32.xlu0 %v145
    %v147 = vpop.xlane.xlu0 %146
    %v148 = vsel %vm144, %v137, -3e+38
    %149 = vmax.xlane.f32.xlu0 %v148
    %v150 = vpop.xlane.xlu0 %149
    %v151 = vsub.f32 %v137, %v147
    %v152 = vsub.f32 %v137, %v150
    %v153 = vsel %vm144, %v152, -3e+38
    %v154 = vsel %vm141, %v151, %v153
    %v155 = vmul.f32 %v154, 1.442695
    %v156 = vpow.pop %v155
    %v157 = vsel %vm141, %v156, 0.0
    %158 = vadd.xlane.f32.xlu0 %v157
    %v159 = vpop.xlane.xlu0 %158
    %v160 = vsel %vm144, %v156, 0.0
    %161 = vadd.xlane.f32.xlu0 %v160
    %v162 = vpop.xlane.xlu0 %161
    %v163 = vrcp.pop %v159
    %v164 = vmul.f32 %v159, %v163
    %v165 = vsub.f32 2.0, %v164
    %v166 = vmul.f32 %v163, %v165
    %v167 = vrcp.pop %v162
    %v168 = vmul.f32 %v162, %v167
    %v169 = vsub.f32 2.0, %v168
    %v170 = vmul.f32 %v167, %v169
    %v171 = vsel %vm141, %v166, %v170
    %v172 = vmul.f32 %v156, %v171
    %173 = vst [vmem:[#allocation8] sm:$0xff] %v172
    // Predicated region
    $region34: #{tpu_custom_call.1} parent=1 // pred_check
      _
    $region35: #{tpu_custom_call.1} parent=1 // pred_check_branch
      %175 = sbr.rel (0) target = $region37
    $region36: #{tpu_custom_call.1} parent=1 // pred_region
      %177 = vsyncadd [#allocation4], 0
      %s179 = sshll.u32 [#allocation8], 4
      %s180 = int_to_ptr.vmem [resolvable:$true] %s179
      %s181 = sshll.u32 %s5, 4
      %s182 = int_to_ptr.hbm [resolvable:$true] %s181
      %184 = dma.vmem_to_hbm [thread:$0]  %s180, 128, %s182, [#allocation4]
    $region37: #{tpu_custom_call.1} parent=1 // pred_fallthru
      _
    // Predicated region
    $region38: #{tpu_custom_call.1} parent=1 // pred_check
      _
    $region39: #{tpu_custom_call.1} parent=1 // pred_check_branch
      %186 = sbr.rel (0) target = $region41
    $region40: #{tpu_custom_call.1} parent=1 // pred_region
      %188 = dma.done [#allocation4], 128
    $region41: #{tpu_custom_call.1} parent=1 // pred_fallthru
      _
    %189 = vsyncpa [#allocation3], 1
    %190 = vsyncpa [#allocation6], 1
    %191 = vsyncpa [#allocation4], 1

</llo_original>
